<compile_context>
chip_gen: v7x
topology: tpu7x:2x2x1
jax: 0.10.0
libtpu: 0.0.40
codegen_flags: <defaults>
</compile_context>

<pallas_src>
import jax
import jax.numpy as jnp
from jax.experimental import pallas as pl
from jax.experimental.pallas import tpu as pltpu


# -----------------------------------------------------------------------------
# DDPM schedules (pure JAX glue — buffer setup, exactly mirrors the torch code)
# -----------------------------------------------------------------------------
def ddpm_schedules(beta1, beta2, T):
    assert beta1 < beta2 < 1.0, "beta1 and beta2 must be in (0, 1)"
    beta_t = (beta2 - beta1) * jnp.arange(0, T + 1, dtype=jnp.float32) / T + beta1
    sqrt_beta_t = jnp.sqrt(beta_t)
    alpha_t = 1.0 - beta_t
    log_alpha_t = jnp.log(alpha_t)
    alphabar_t = jnp.exp(jnp.cumsum(log_alpha_t, axis=0))
    sqrtab = jnp.sqrt(alphabar_t)
    oneover_sqrta = 1.0 / jnp.sqrt(alpha_t)
    sqrtmab = jnp.sqrt(1.0 - alphabar_t)
    mab_over_sqrtmab_inv = (1.0 - alpha_t) / sqrtmab
    return {
        "alpha_t": alpha_t,
        "oneover_sqrta": oneover_sqrta,
        "sqrt_beta_t": sqrt_beta_t,
        "alphabar_t": alphabar_t,
        "sqrtab": sqrtab,
        "sqrtmab": sqrtmab,
        "mab_over_sqrtmab": mab_over_sqrtmab_inv,
    }


# -----------------------------------------------------------------------------
# Fused kernel: per batch element b (all data in native NCHW (C, H*W) layout)
#   x_t  = sqrtab[b] * x + sqrtmab[b] * noise          (q-sample, VMEM only)
#   h    = relu(W1^T @ x_t + b1 + cond[b])             (Hd, HW)
#   m    = W2^T @ h + b2                               (C, HW)   -> HBM (output)
#   psum = sum((noise - m)^2)                          (1, 1)    -> HBM (partial MSE)
# -----------------------------------------------------------------------------
def _ddpm_fused_kernel(sa_ref, sm_ref, x_ref, noise_ref, cond_ref,
                       w1t_ref, b1_ref, w2t_ref, b2_ref,
                       m_ref, psum_ref):
    b = pl.program_id(0)
    sa = sa_ref[b]                 # scalar from SMEM
    sm = sm_ref[b]

    x = x_ref[0]                   # (C, HW)
    noise = noise_ref[0]           # (C, HW)

    # --- fused q-sample: x_t lives only in VMEM/vregs, never hits HBM ---
    x_t = sa * x + sm * noise      # (C, HW)

    # --- synthetic denoiser, channel-mix as (small) MXU matmuls ---
    h = jnp.dot(w1t_ref[...], x_t, preferred_element_type=jnp.float32)   # (Hd, HW)
    h = h + b1_ref[...] + cond_ref[0]                                    # (Hd,1) bcast
    h = jnp.maximum(h, 0.0)
    out = jnp.dot(w2t_ref[...], h, preferred_element_type=jnp.float32)   # (C, HW)
    out = out + b2_ref[...]                                              # (C,1) bcast

    # lane-dense store: last dim is HW (multiple of 128), i.e. native NCHW slab
    m_ref[0] = out

    # --- fused per-batch partial MSE (noise already resident, m never re-read) ---
    d = noise - out
    psum_ref[0] = jnp.sum(d * d, keepdims=True)                          # (1, 1)


def ddpm_denoise_fused(params, x, noise, sqrtab_ts, sqrtmab_ts, c, t_norm,
                       context_mask):
    """Fused q-sample + synthetic denoiser + partial MSE. Returns (loss, m)."""
    B, C, H, W = x.shape
    HW = H * W
    Hd = params["w1"].shape[1]

    # conditioning glue (tiny, plain JAX): masked class embedding + time emb
    c_emb = params["class_emb"][c] * (1.0 - context_mask)[:, None]        # (B, Hd)
    t_emb = t_norm[:, None] * params["w_time"][None, :]                   # (B, Hd)
    cond = (c_emb + t_emb).astype(jnp.float32)[:, :, None]                # (B, Hd, 1)

    # NCHW is already (B, C, H*W): pure metadata reshape, no transpose.
    x3 = x.reshape(B, C, HW)
    n3 = noise.reshape(B, C, HW)

    # weights oriented so the kernel does (Hd,C)@(C,HW) and (C,Hd)@(Hd,HW)
    w1t = params["w1"].T                      # (Hd, C)
    b1 = params["b1"].reshape(Hd, 1)          # (Hd, 1)
    w2t = params["w2"].T                      # (C, Hd)
    b2 = params["b2"].reshape(C, 1)           # (C, 1)

    # advisory scheduling hint for XLA around the custom call
    flops = 4 * B * C * Hd * HW + B * HW * (7 * C + 3 * Hd)
    bytes_accessed = 4 * (3 * B * C * HW + B * Hd + 2 * C * Hd + Hd + C + 3 * B)
    cost = pl.CostEstimate(flops=flops, transcendentals=0,
                           bytes_accessed=bytes_accessed)

    m3, psum = pl.pallas_call(
        _ddpm_fused_kernel,
        out_shape=(
            jax.ShapeDtypeStruct((B, C, HW), jnp.float32),   # m (native NCHW slab)
            jax.ShapeDtypeStruct((B, 1, 1), jnp.float32),    # per-batch sum((n-m)^2)
        ),
        grid=(B,),
        in_specs=[
            pl.BlockSpec(memory_space=pltpu.MemorySpace.SMEM),    # sqrtab[ts]  (B,)
            pl.BlockSpec(memory_space=pltpu.MemorySpace.SMEM),    # sqrtmab[ts] (B,)
            pl.BlockSpec((1, C, HW), lambda b: (b, 0, 0)),        # x
            pl.BlockSpec((1, C, HW), lambda b: (b, 0, 0)),        # noise
            pl.BlockSpec((1, Hd, 1), lambda b: (b, 0, 0)),        # cond (per-batch block)
            pl.BlockSpec((Hd, C), lambda b: (0, 0)),              # W1^T
            pl.BlockSpec((Hd, 1), lambda b: (0, 0)),              # b1
            pl.BlockSpec((C, Hd), lambda b: (0, 0)),              # W2^T
            pl.BlockSpec((C, 1), lambda b: (0, 0)),               # b2
        ],
        out_specs=(
            pl.BlockSpec((1, C, HW), lambda b: (b, 0, 0)),
            pl.BlockSpec((1, 1, 1), lambda b: (b, 0, 0)),
        ),
        compiler_params=pltpu.CompilerParams(
            dimension_semantics=("parallel",),
            vmem_limit_bytes=32 * 1024 * 1024,
        ),
        cost_estimate=cost,
    )(sqrtab_ts, sqrtmab_ts, x3, n3, cond, w1t, b1, w2t, b2)

    m = m3.reshape(B, C, H, W)
    # Finalize MSE with the FULL element count (correct regardless of tiling).
    loss = jnp.sum(psum) / float(B * C * H * W)
    return loss, m


# -----------------------------------------------------------------------------
# DDPM module (forward pass)
# -----------------------------------------------------------------------------
class DDPM:
    def __init__(self, nn_params, betas, n_T, drop_prob=0.1):
        self.sched = ddpm_schedules(betas[0], betas[1], n_T)
        self.n_T = n_T
        self.drop_prob = drop_prob
        self.nn_params = nn_params

    def forward(self, key, x, c):
        B = x.shape[0]
        k_ts, k_noise, k_mask = jax.random.split(key, 3)

        # torch.randint(1, n_T+1, (B,)) / randn_like(x) / bernoulli(drop_prob)
        _ts = jax.random.randint(k_ts, (B,), 1, self.n_T + 1)
        noise = jax.random.normal(k_noise, x.shape, dtype=jnp.float32)
        context_mask = jax.random.bernoulli(
            k_mask, self.drop_prob, c.shape).astype(jnp.float32)

        sqrtab_ts = self.sched["sqrtab"][_ts].astype(jnp.float32)     # (B,)
        sqrtmab_ts = self.sched["sqrtmab"][_ts].astype(jnp.float32)   # (B,)
        t_norm = _ts.astype(jnp.float32) / float(self.n_T)

        # x_t = sqrtab*x + sqrtmab*noise ; m = nn_model(x_t, c, ts/n_T, mask)
        # out = MSELoss()(noise, m)   — all fused into one pallas_call.
        loss, m = ddpm_denoise_fused(
            self.nn_params, x, noise, sqrtab_ts, sqrtmab_ts, c, t_norm,
            context_mask)
        return loss, noise, m


def init_nn_params(C, Hd, n_classes, seed=42):
    k = jax.random.PRNGKey(seed)
    k1, k2, k3, k4 = jax.random.split(k, 4)
    return {
        "w1": 0.1 * jax.random.normal(k1, (C, Hd), dtype=jnp.float32),
        "b1": jnp.zeros((1, Hd), dtype=jnp.float32),
        "w2": 0.1 * jax.random.normal(k2, (Hd, C), dtype=jnp.float32),
        "b2": jnp.zeros((1, C), dtype=jnp.float32),
        "class_emb": 0.1 * jax.random.normal(k3, (n_classes, Hd), dtype=jnp.float32),
        "w_time": 0.1 * jax.random.normal(k4, (Hd,), dtype=jnp.float32),
    }


if __name__ == "__main__":
    B, C, H, W = 2, 4, 16, 16
    Hd, n_classes, n_T = 32, 10, 400

    key = jax.random.PRNGKey(0)
    kx, kc, kfwd = jax.random.split(key, 3)
    x = jax.random.normal(kx, (B, C, H, W), dtype=jnp.float32)   # NCHW, like torch
    c = jax.random.randint(kc, (B,), 0, n_classes)               # class labels

    params = init_nn_params(C, Hd, n_classes)
    ddpm = DDPM(params, betas=(1e-4, 0.02), n_T=n_T, drop_prob=0.1)

    loss, noise, m = ddpm.forward(kfwd, x, c)
    jax.block_until_ready((loss, noise, m))

    assert noise.shape == x.shape and m.shape == x.shape and loss.shape == ()
    assert bool(jnp.isfinite(loss))
    print("KERNEL_OK")
</pallas_src>

<mosaic_0001>
module attributes {stable_mosaic.version = 11 : i64} {
  func.func @_ddpm_fused_kernel(%arg0: i32, %arg1: memref<2xf32, #tpu.memory_space<smem>>, %arg2: memref<2xf32, #tpu.memory_space<smem>>, %arg3: memref<1x4x256xf32, #tpu.memory_space<vmem>>, %arg4: memref<1x4x256xf32, #tpu.memory_space<vmem>>, %arg5: memref<1x32x1xf32, #tpu.memory_space<vmem>>, %arg6: memref<32x4xf32, #tpu.memory_space<vmem>>, %arg7: memref<32x1xf32, #tpu.memory_space<vmem>>, %arg8: memref<4x32xf32, #tpu.memory_space<vmem>>, %arg9: memref<4x1xf32, #tpu.memory_space<vmem>>, %arg10: memref<1x4x256xf32, #tpu.memory_space<vmem>>, %arg11: memref<1x1x1xf32, #tpu.memory_space<vmem>>) attributes {dimension_semantics = [#tpu.dimension_semantics<parallel>], iteration_bounds = array<i64: 2>, scalar_prefetch = 0 : i64, scratch_operands = 0 : i64, tpu.core_type = #tpu.core_type<tc>, window_params = [{transform_indices = @transform_0, window_bounds = array<i64: 2>}, {transform_indices = @transform_1, window_bounds = array<i64: 2>}, {transform_indices = @transform_2, window_bounds = array<i64: 1, 4, 256>}, {transform_indices = @transform_3, window_bounds = array<i64: 1, 4, 256>}, {transform_indices = @transform_4, window_bounds = array<i64: 1, 32, 1>}, {pipeline_mode = #tpu.pipeline_mode<synchronous>, transform_indices = @transform_5, window_bounds = array<i64: 32, 4>}, {pipeline_mode = #tpu.pipeline_mode<synchronous>, transform_indices = @transform_6, window_bounds = array<i64: 32, 1>}, {pipeline_mode = #tpu.pipeline_mode<synchronous>, transform_indices = @transform_7, window_bounds = array<i64: 4, 32>}, {pipeline_mode = #tpu.pipeline_mode<synchronous>, transform_indices = @transform_8, window_bounds = array<i64: 4, 1>}, {transform_indices = @transform_9, window_bounds = array<i64: 1, 4, 256>}, {transform_indices = @transform_10, window_bounds = array<i64: 1, 1, 1>}]} {
    %0 = arith.index_cast %arg0 : i32 to index
    %1 = memref.load %arg1[%0] : memref<2xf32, #tpu.memory_space<smem>>
    %2 = arith.index_cast %arg0 : i32 to index
    %3 = memref.load %arg2[%2] : memref<2xf32, #tpu.memory_space<smem>>
    %c0 = arith.constant 0 : index
    %c0_0 = arith.constant 0 : index
    %c0_1 = arith.constant 0 : index
    %4 = vector.load %arg3[%c0, %c0_0, %c0_1] : memref<1x4x256xf32, #tpu.memory_space<vmem>>, vector<1x4x256xf32>
    %5 = vector.shape_cast %4 : vector<1x4x256xf32> to vector<4x256xf32>
    %c0_2 = arith.constant 0 : index
    %c0_3 = arith.constant 0 : index
    %c0_4 = arith.constant 0 : index
    %6 = vector.load %arg4[%c0_2, %c0_3, %c0_4] : memref<1x4x256xf32, #tpu.memory_space<vmem>>, vector<1x4x256xf32>
    %7 = vector.shape_cast %6 : vector<1x4x256xf32> to vector<4x256xf32>
    %8 = vector.broadcast %1 : f32 to vector<4x256xf32>
    %9 = arith.mulf %8, %5 : vector<4x256xf32>
    %10 = vector.broadcast %3 : f32 to vector<4x256xf32>
    %11 = arith.mulf %10, %7 : vector<4x256xf32>
    %12 = arith.addf %9, %11 : vector<4x256xf32>
    %c0_5 = arith.constant 0 : index
    %c0_6 = arith.constant 0 : index
    %13 = vector.load %arg6[%c0_5, %c0_6] : memref<32x4xf32, #tpu.memory_space<vmem>>, vector<32x4xf32>
    %cst = arith.constant dense<0.000000e+00> : vector<32x256xf32>
    %14 = tpu.matmul %13, %12, %cst {dimension_numbers = #tpu.dot_dimension_numbers<[1], [0], [0], [1], [0, 0, 1, 1], [], []>} : vector<32x4xf32>, vector<4x256xf32>, vector<32x256xf32> -> vector<32x256xf32>
    %c0_7 = arith.constant 0 : index
    %c0_8 = arith.constant 0 : index
    %15 = vector.load %arg7[%c0_7, %c0_8] : memref<32x1xf32, #tpu.memory_space<vmem>>, vector<32x1xf32>
    %16 = vector.broadcast %15 : vector<32x1xf32> to vector<32x256xf32>
    %17 = arith.addf %14, %16 : vector<32x256xf32>
    %c0_9 = arith.constant 0 : index
    %c0_10 = arith.constant 0 : index
    %c0_11 = arith.constant 0 : index
    %18 = vector.load %arg5[%c0_9, %c0_10, %c0_11] : memref<1x32x1xf32, #tpu.memory_space<vmem>>, vector<1x32x1xf32>
    %19 = vector.shape_cast %18 : vector<1x32x1xf32> to vector<32x1xf32>
    %20 = vector.broadcast %19 : vector<32x1xf32> to vector<32x256xf32>
    %21 = arith.addf %17, %20 : vector<32x256xf32>
    %cst_12 = arith.constant 0.000000e+00 : f32
    %22 = vector.broadcast %cst_12 : f32 to vector<32x256xf32>
    %23 = arith.maximumf %21, %22 : vector<32x256xf32>
    %c0_13 = arith.constant 0 : index
    %c0_14 = arith.constant 0 : index
    %24 = vector.load %arg8[%c0_13, %c0_14] : memref<4x32xf32, #tpu.memory_space<vmem>>, vector<4x32xf32>
    %cst_15 = arith.constant dense<0.000000e+00> : vector<4x256xf32>
    %25 = tpu.matmul %24, %23, %cst_15 {dimension_numbers = #tpu.dot_dimension_numbers<[1], [0], [0], [1], [0, 0, 1, 1], [], []>} : vector<4x32xf32>, vector<32x256xf32>, vector<4x256xf32> -> vector<4x256xf32>
    %c0_16 = arith.constant 0 : index
    %c0_17 = arith.constant 0 : index
    %26 = vector.load %arg9[%c0_16, %c0_17] : memref<4x1xf32, #tpu.memory_space<vmem>>, vector<4x1xf32>
    %27 = vector.broadcast %26 : vector<4x1xf32> to vector<4x256xf32>
    %28 = arith.addf %25, %27 : vector<4x256xf32>
    %c0_18 = arith.constant 0 : index
    %c0_19 = arith.constant 0 : index
    %c0_20 = arith.constant 0 : index
    %29 = vector.load %arg10[%c0_18, %c0_19, %c0_20] : memref<1x4x256xf32, #tpu.memory_space<vmem>>, vector<1x4x256xf32>
    %30 = vector.shape_cast %29 : vector<1x4x256xf32> to vector<4x256xf32>
    %31 = vector.shape_cast %28 : vector<4x256xf32> to vector<1x4x256xf32>
    tpu.vector_store %arg10[%c0_18, %c0_19, %c0_20], %31 {strides = array<i32>} : memref<1x4x256xf32, #tpu.memory_space<vmem>>, vector<1x4x256xf32>,
    %32 = arith.subf %7, %28 : vector<4x256xf32>
    %33 = arith.mulf %32, %32 : vector<4x256xf32>
    %34 = vector.shape_cast %33 : vector<4x256xf32> to vector<1x4x256xf32>
    %cst_21 = arith.constant dense<0.000000e+00> : vector<1xf32>
    %35 = vector.multi_reduction <add>, %34, %cst_21 [1, 2] : vector<1x4x256xf32> to vector<1xf32>
    %36 = vector.shape_cast %35 : vector<1xf32> to vector<1x1x1xf32>
    %37 = vector.extract %36[0, 0, 0] : f32 from vector<1x1x1xf32>
    %38 = vector.broadcast %37 : f32 to vector<1x1xf32>
    %c0_22 = arith.constant 0 : index
    %c0_23 = arith.constant 0 : index
    %c0_24 = arith.constant 0 : index
    %39 = vector.load %arg11[%c0_22, %c0_23, %c0_24] : memref<1x1x1xf32, #tpu.memory_space<vmem>>, vector<1x1x1xf32>
    %40 = vector.shape_cast %39 : vector<1x1x1xf32> to vector<1x1xf32>
    %41 = vector.shape_cast %38 : vector<1x1xf32> to vector<1x1x1xf32>
    tpu.vector_store %arg11[%c0_22, %c0_23, %c0_24], %41 {strides = array<i32>} : memref<1x1x1xf32, #tpu.memory_space<vmem>>, vector<1x1x1xf32>,
    return
  }
  func.func @transform_0(%arg0: i32) -> i32 {
    %c0_i32 = arith.constant 0 : i32
    %c0_i32_0 = arith.constant 0 : i32
    return %c0_i32 : i32
  }
  func.func @transform_1(%arg0: i32) -> i32 {
    %c0_i32 = arith.constant 0 : i32
    %c0_i32_0 = arith.constant 0 : i32
    return %c0_i32 : i32
  }
  func.func @transform_2(%arg0: i32) -> (i32, i32, i32) {
    %c0_i32 = arith.constant 0 : i32
    %c0_i32_0 = arith.constant 0 : i32
    %c0_i32_1 = arith.constant 0 : i32
    return %arg0, %c0_i32, %c0_i32_0 : i32, i32, i32
  }
  func.func @transform_3(%arg0: i32) -> (i32, i32, i32) {
    %c0_i32 = arith.constant 0 : i32
    %c0_i32_0 = arith.constant 0 : i32
    %c0_i32_1 = arith.constant 0 : i32
    return %arg0, %c0_i32, %c0_i32_0 : i32, i32, i32
  }
  func.func @transform_4(%arg0: i32) -> (i32, i32, i32) {
    %c0_i32 = arith.constant 0 : i32
    %c0_i32_0 = arith.constant 0 : i32
    %c0_i32_1 = arith.constant 0 : i32
    return %arg0, %c0_i32, %c0_i32_0 : i32, i32, i32
  }
  func.func @transform_5(%arg0: i32) -> (i32, i32) {
    %c0_i32 = arith.constant 0 : i32
    %c0_i32_0 = arith.constant 0 : i32
    %c0_i32_1 = arith.constant 0 : i32
    return %c0_i32, %c0_i32_0 : i32, i32
  }
  func.func @transform_6(%arg0: i32) -> (i32, i32) {
    %c0_i32 = arith.constant 0 : i32
    %c0_i32_0 = arith.constant 0 : i32
    %c0_i32_1 = arith.constant 0 : i32
    return %c0_i32, %c0_i32_0 : i32, i32
  }
  func.func @transform_7(%arg0: i32) -> (i32, i32) {
    %c0_i32 = arith.constant 0 : i32
    %c0_i32_0 = arith.constant 0 : i32
    %c0_i32_1 = arith.constant 0 : i32
    return %c0_i32, %c0_i32_0 : i32, i32
  }
  func.func @transform_8(%arg0: i32) -> (i32, i32) {
    %c0_i32 = arith.constant 0 : i32
    %c0_i32_0 = arith.constant 0 : i32
    %c0_i32_1 = arith.constant 0 : i32
    return %c0_i32, %c0_i32_0 : i32, i32
  }
  func.func @transform_9(%arg0: i32) -> (i32, i32, i32) {
    %c0_i32 = arith.constant 0 : i32
    %c0_i32_0 = arith.constant 0 : i32
    %c0_i32_1 = arith.constant 0 : i32
    return %arg0, %c0_i32, %c0_i32_0 : i32, i32, i32
  }
  func.func @transform_10(%arg0: i32) -> (i32, i32, i32) {
    %c0_i32 = arith.constant 0 : i32
    %c0_i32_0 = arith.constant 0 : i32
    %c0_i32_1 = arith.constant 0 : i32
    return %arg0, %c0_i32, %c0_i32_0 : i32, i32, i32
  }
}

</mosaic_0001>

<llo_original>
// kernel: tpu_custom_call.1
$region0: #{tpu_custom_call.1}
  #allocation0 [shape = 'u32[]', space=smem, size = 0x4, offset = 0x4, fixed_abs, tag = 'smem constant byte address 0x4 - core index']
  #allocation1 [shape = 'u32[144,128]{1,0:T(1,128)}', space=vmem, size = 0x12000, scoped, tag = 'internal scratch']
  %s0 = inlined_call_operand.vmem [shape: f32[2], index: 0, kind: input, shape index: {}]
  %s1 = inlined_call_operand.vmem [shape: f32[2], index: 1, kind: input, shape index: {}]
  %s2 = inlined_call_operand.vmem [shape: f32[2,4,256], index: 2, kind: input, shape index: {}]
  %s3 = inlined_call_operand.vmem [shape: f32[2,4,256], index: 3, kind: input, shape index: {}]
  %s4 = inlined_call_operand.vmem [shape: f32[2,32,1], index: 4, kind: input, shape index: {}]
  %s5 = inlined_call_operand.vmem [shape: f32[32,4], index: 5, kind: input, shape index: {}]
  %s6 = inlined_call_operand.vmem [shape: f32[32,1], index: 6, kind: input, shape index: {}]
  %s7 = inlined_call_operand.vmem [shape: f32[4,32], index: 7, kind: input, shape index: {}]
  %s8 = inlined_call_operand.vmem [shape: f32[4,1], index: 8, kind: input, shape index: {}]
  %s9 = inlined_call_operand.hbm [shape: f32[2,4,256], index: 9, kind: output, shape index: {0}]
  %s10 = inlined_call_operand.vmem [shape: f32[2,1,1], index: 10, kind: output, shape index: {1}]
  %11 = xla_tuple %s9, %s10
  %s12 = sld [smem:[#allocation0]]
  $region85: #{tpu_custom_call.1} parent=0
    _
  %s14 = ssub.s32 1, %s12
  %s15 = scalar_select 0, %s14, %s12
  $region1: #{tpu_custom_call.1} parent=0
    #allocation2 [shape = 'u8[512]{0}', space=smem, size = 0x200, scoped, tag = 'input window, operand 0, single buffered']
    #allocation3 [shape = 's32[2]{0}', space=sflag, size = 0x8, scoped, tag = 'scoped memory for tpu_custom_call.1']
    #allocation4 [shape = 's32[2]{0}', space=sflag, size = 0x8, scoped, tag = 'scoped memory for tpu_custom_call.1']
    #allocation5 [shape = 'u8[512]{0}', space=smem, size = 0x200, scoped, tag = 'input window, operand 1, single buffered']
    #allocation6 [shape = 's32[1]{0}', space=sflag, size = 0x4, scoped, tag = 'scoped memory for tpu_custom_call.1']
    #allocation7 [shape = 'u8[8192]{0}', space=vmem, size = 0x2000, scoped, tag = 'output window, operand 0']
    %16 = vsyncpa [#allocation4], 0
    %17 = vsyncpa [#allocation6], 0
    %18 = vsyncpa [#allocation3], 0
    %s19 = scalar_lea.sflag [#allocation3], 1
    %20 = vsyncpa %s19, 0
    loop: start=0, step=1, limit=4
    $region2: #{tpu_custom_call.1} parent=1 // loop_pre_header
      _
    $region3: #{tpu_custom_call.1} parent=1 // loop_header
      %s22 = sphi 0, %s26
      %p23 = scmp.ge.s32.totalorder %s22, 4
      %s30 = sphi 0, %s30
      %s32 = sphi 0, %s30
      %s33 = sphi 0, %s32
      %s47 = sphi 0, %s33
      %s51 = sphi 0, %s51
      %s53 = sphi 0, %s51
      %s54 = sphi 0, %s53
      %s68 = sphi 0, %s54
      %s74 = sphi 0, %s76
      %s77 = sphi 0, %s74
      %s78 = sphi 0, %s77
      %s94 = sphi 0, %s78
      %s100 = sphi 0, %s102
      %s103 = sphi 0, %s100
      %s104 = sphi 0, %s103
      %s120 = sphi 0, %s104
      %s126 = sphi 0, %s128
      %s129 = sphi 0, %s126
      %s130 = sphi 0, %s129
      %s146 = sphi 0, %s130
      %s150 = sphi 0, %s150
      %s152 = sphi 0, %s150
      %s153 = sphi 0, %s152
      %s167 = sphi 0, %s153
      %s171 = sphi 0, %s171
      %s173 = sphi 0, %s171
      %s174 = sphi 0, %s173
      %s188 = sphi 0, %s174
      %s192 = sphi 0, %s192
      %s194 = sphi 0, %s192
      %s195 = sphi 0, %s194
      %s209 = sphi 0, %s195
      %s213 = sphi 0, %s213
      %s215 = sphi 0, %s213
      %s216 = sphi 0, %s215
      %s230 = sphi 0, %s216
      %s236 = sphi 0, %s238
      %s239 = sphi 0, %s236
      %s240 = sphi 0, %s239
      %s256 = sphi 0, %s240
      %s262 = sphi 0, %s264
      %s265 = sphi 0, %s262
      %s266 = sphi 0, %s265
      %s282 = sphi 0, %s266
    $region4: #{tpu_custom_call.1} parent=1 // loop_header_branch
      %25 = sbr.rel (%p23) target = $region8
    $region5: #{tpu_custom_call.1} parent=1 // loop_body
      %s27 = ssub.s32 %s22, 1
      %s28 = ssub.s32 %s22, 2
      %s29 = sadd.s32 %s22, 1
      %s31 = sadd.s32 %s30, 1
      %p34 = scmp.eq.s32.totalorder %s22, 1
      %p35 = scmp.ne.s32.totalorder %s30, %s32
      %p36 = scmp.eq.s32.totalorder %s22, 0
      %p37 = por %p35, %p36
      %p38 = scmp.ne.s32.totalorder %s30, %s32
      %p39 = scmp.eq.s32.totalorder %s27, 1
      %p40 = por %p38, %p39
      %p41 = scmp.ne.s32.totalorder %s32, %s33
      %p42 = scmp.eq.s32.totalorder %s27, 0
      %p43 = por %p41, %p42
      %p44 = scmp.ne.s32.totalorder %s32, %s33
      %p45 = scmp.eq.s32.totalorder %s28, 1
      %p46 = por %p44, %p45
      %p48 = scmp.ne.s32.totalorder %s33, %s47
      %p49 = scmp.eq.s32.totalorder %s28, 0
      %p50 = por %p48, %p49
      %s52 = sadd.s32 %s51, 1
      %p55 = scmp.eq.s32.totalorder %s22, 1
      %p56 = scmp.ne.s32.totalorder %s51, %s53
      %p57 = scmp.eq.s32.totalorder %s22, 0
      %p58 = por %p56, %p57
      %p59 = scmp.ne.s32.totalorder %s51, %s53
      %p60 = scmp.eq.s32.totalorder %s27, 1
      %p61 = por %p59, %p60
      %p62 = scmp.ne.s32.totalorder %s53, %s54
      %p63 = scmp.eq.s32.totalorder %s27, 0
      %p64 = por %p62, %p63
      %p65 = scmp.ne.s32.totalorder %s53, %s54
      %p66 = scmp.eq.s32.totalorder %s28, 1
      %p67 = por %p65, %p66
      %p69 = scmp.ne.s32.totalorder %s54, %s68
      %p70 = scmp.eq.s32.totalorder %s28, 0
      %p71 = por %p69, %p70
      %s72 = ssub.s32 %s22, %s29
      %p73 = scmp.eq.s32.totalorder %s72, 0
      %s75 = sadd.s32 %s74, 1
      %s76 = scalar_select %p73, %s74, %s75
      %p79 = pneg %p73
      %p80 = scmp.eq.s32.totalorder %s22, 1
      %p81 = por %p79, %p80
      %p82 = scmp.ne.s32.totalorder %s74, %s77
      %p83 = scmp.eq.s32.totalorder %s22, 0
      %p84 = por %p82, %p83
      %p85 = scmp.ne.s32.totalorder %s74, %s77
      %p86 = scmp.eq.s32.totalorder %s27, 1
      %p87 = por %p85, %p86
      %p88 = scmp.ne.s32.totalorder %s77, %s78
      %p89 = scmp.eq.s32.totalorder %s27, 0
      %p90 = por %p88, %p89
      %p91 = scmp.ne.s32.totalorder %s77, %s78
      %p92 = scmp.eq.s32.totalorder %s28, 1
      %p93 = por %p91, %p92
      %p95 = scmp.ne.s32.totalorder %s78, %s94
      %p96 = scmp.eq.s32.totalorder %s28, 0
      %p97 = por %p95, %p96
      %s98 = ssub.s32 %s22, %s29
      %p99 = scmp.eq.s32.totalorder %s98, 0
      %s101 = sadd.s32 %s100, 1
      %s102 = scalar_select %p99, %s100, %s101
      %p105 = pneg %p99
      %p106 = scmp.eq.s32.totalorder %s22, 1
      %p107 = por %p105, %p106
      %p108 = scmp.ne.s32.totalorder %s100, %s103
      %p109 = scmp.eq.s32.totalorder %s22, 0
      %p110 = por %p108, %p109
      %p111 = scmp.ne.s32.totalorder %s100, %s103
      %p112 = scmp.eq.s32.totalorder %s27, 1
      %p113 = por %p111, %p112
      %p114 = scmp.ne.s32.totalorder %s103, %s104
      %p115 = scmp.eq.s32.totalorder %s27, 0
      %p116 = por %p114, %p115
      %p117 = scmp.ne.s32.totalorder %s103, %s104
      %p118 = scmp.eq.s32.totalorder %s28, 1
      %p119 = por %p117, %p118
      %p121 = scmp.ne.s32.totalorder %s104, %s120
      %p122 = scmp.eq.s32.totalorder %s28, 0
      %p123 = por %p121, %p122
      %s124 = ssub.s32 %s22, %s29
      %p125 = scmp.eq.s32.totalorder %s124, 0
      %s127 = sadd.s32 %s126, 1
      %s128 = scalar_select %p125, %s126, %s127
      %p131 = pneg %p125
      %p132 = scmp.eq.s32.totalorder %s22, 1
      %p133 = por %p131, %p132
      %p134 = scmp.ne.s32.totalorder %s126, %s129
      %p135 = scmp.eq.s32.totalorder %s22, 0
      %p136 = por %p134, %p135
      %p137 = scmp.ne.s32.totalorder %s126, %s129
      %p138 = scmp.eq.s32.totalorder %s27, 1
      %p139 = por %p137, %p138
      %p140 = scmp.ne.s32.totalorder %s129, %s130
      %p141 = scmp.eq.s32.totalorder %s27, 0
      %p142 = por %p140, %p141
      %p143 = scmp.ne.s32.totalorder %s129, %s130
      %p144 = scmp.eq.s32.totalorder %s28, 1
      %p145 = por %p143, %p144
      %p147 = scmp.ne.s32.totalorder %s130, %s146
      %p148 = scmp.eq.s32.totalorder %s28, 0
      %p149 = por %p147, %p148
      %s151 = sadd.s32 %s150, 1
      %p154 = scmp.eq.s32.totalorder %s22, 1
      %p155 = scmp.ne.s32.totalorder %s150, %s152
      %p156 = scmp.eq.s32.totalorder %s22, 0
      %p157 = por %p155, %p156
      %p158 = scmp.ne.s32.totalorder %s150, %s152
      %p159 = scmp.eq.s32.totalorder %s27, 1
      %p160 = por %p158, %p159
      %p161 = scmp.ne.s32.totalorder %s152, %s153
      %p162 = scmp.eq.s32.totalorder %s27, 0
      %p163 = por %p161, %p162
      %p164 = scmp.ne.s32.totalorder %s152, %s153
      %p165 = scmp.eq.s32.totalorder %s28, 1
      %p166 = por %p164, %p165
      %p168 = scmp.ne.s32.totalorder %s153, %s167
      %p169 = scmp.eq.s32.totalorder %s28, 0
      %p170 = por %p168, %p169
      %s172 = sadd.s32 %s171, 1
      %p175 = scmp.eq.s32.totalorder %s22, 1
      %p176 = scmp.ne.s32.totalorder %s171, %s173
      %p177 = scmp.eq.s32.totalorder %s22, 0
      %p178 = por %p176, %p177
      %p179 = scmp.ne.s32.totalorder %s171, %s173
      %p180 = scmp.eq.s32.totalorder %s27, 1
      %p181 = por %p179, %p180
      %p182 = scmp.ne.s32.totalorder %s173, %s174
      %p183 = scmp.eq.s32.totalorder %s27, 0
      %p184 = por %p182, %p183
      %p185 = scmp.ne.s32.totalorder %s173, %s174
      %p186 = scmp.eq.s32.totalorder %s28, 1
      %p187 = por %p185, %p186
      %p189 = scmp.ne.s32.totalorder %s174, %s188
      %p190 = scmp.eq.s32.totalorder %s28, 0
      %p191 = por %p189, %p190
      %s193 = sadd.s32 %s192, 1
      %p196 = scmp.eq.s32.totalorder %s22, 1
      %p197 = scmp.ne.s32.totalorder %s192, %s194
      %p198 = scmp.eq.s32.totalorder %s22, 0
      %p199 = por %p197, %p198
      %p200 = scmp.ne.s32.totalorder %s192, %s194
      %p201 = scmp.eq.s32.totalorder %s27, 1
      %p202 = por %p200, %p201
      %p203 = scmp.ne.s32.totalorder %s194, %s195
      %p204 = scmp.eq.s32.totalorder %s27, 0
      %p205 = por %p203, %p204
      %p206 = scmp.ne.s32.totalorder %s194, %s195
      %p207 = scmp.eq.s32.totalorder %s28, 1
      %p208 = por %p206, %p207
      %p210 = scmp.ne.s32.totalorder %s195, %s209
      %p211 = scmp.eq.s32.totalorder %s28, 0
      %p212 = por %p210, %p211
      %s214 = sadd.s32 %s213, 1
      %p217 = scmp.eq.s32.totalorder %s22, 1
      %p218 = scmp.ne.s32.totalorder %s213, %s215
      %p219 = scmp.eq.s32.totalorder %s22, 0
      %p220 = por %p218, %p219
      %p221 = scmp.ne.s32.totalorder %s213, %s215
      %p222 = scmp.eq.s32.totalorder %s27, 1
      %p223 = por %p221, %p222
      %p224 = scmp.ne.s32.totalorder %s215, %s216
      %p225 = scmp.eq.s32.totalorder %s27, 0
      %p226 = por %p224, %p225
      %p227 = scmp.ne.s32.totalorder %s215, %s216
      %p228 = scmp.eq.s32.totalorder %s28, 1
      %p229 = por %p227, %p228
      %p231 = scmp.ne.s32.totalorder %s216, %s230
      %p232 = scmp.eq.s32.totalorder %s28, 0
      %p233 = por %p231, %p232
      %s234 = ssub.s32 %s22, %s29
      %p235 = scmp.eq.s32.totalorder %s234, 0
      %s237 = sadd.s32 %s236, 1
      %s238 = scalar_select %p235, %s236, %s237
      %p241 = pneg %p235
      %p242 = scmp.eq.s32.totalorder %s22, 1
      %p243 = por %p241, %p242
      %p244 = scmp.ne.s32.totalorder %s236, %s239
      %p245 = scmp.eq.s32.totalorder %s22, 0
      %p246 = por %p244, %p245
      %p247 = scmp.ne.s32.totalorder %s236, %s239
      %p248 = scmp.eq.s32.totalorder %s27, 1
      %p249 = por %p247, %p248
      %p250 = scmp.ne.s32.totalorder %s239, %s240
      %p251 = scmp.eq.s32.totalorder %s27, 0
      %p252 = por %p250, %p251
      %p253 = scmp.ne.s32.totalorder %s239, %s240
      %p254 = scmp.eq.s32.totalorder %s28, 1
      %p255 = por %p253, %p254
      %p257 = scmp.ne.s32.totalorder %s240, %s256
      %p258 = scmp.eq.s32.totalorder %s28, 0
      %p259 = por %p257, %p258
      %s260 = ssub.s32 %s22, %s29
      %p261 = scmp.eq.s32.totalorder %s260, 0
      %s263 = sadd.s32 %s262, 1
      %s264 = scalar_select %p261, %s262, %s263
      %p267 = pneg %p261
      %p268 = scmp.eq.s32.totalorder %s22, 1
      %p269 = por %p267, %p268
      %p270 = scmp.ne.s32.totalorder %s262, %s265
      %p271 = scmp.eq.s32.totalorder %s22, 0
      %p272 = por %p270, %p271
      %p273 = scmp.ne.s32.totalorder %s262, %s265
      %p274 = scmp.eq.s32.totalorder %s27, 1
      %p275 = por %p273, %p274
      %p276 = scmp.ne.s32.totalorder %s265, %s266
      %p277 = scmp.eq.s32.totalorder %s27, 0
      %p278 = por %p276, %p277
      %p279 = scmp.ne.s32.totalorder %s265, %s266
      %p280 = scmp.eq.s32.totalorder %s28, 1
      %p281 = por %p279, %p280
      %p283 = scmp.ne.s32.totalorder %s266, %s282
      %p284 = scmp.eq.s32.totalorder %s28, 0
      %p285 = por %p283, %p284
      %p286 = scmp.le.s32.totalorder 1, %s22
      %p287 = scmp.lt.s32.totalorder %s22, 3
      %p288 = pnand %p286, %p287
      %p289 = pneg %p288
      // Predicated region
      $region9: #{tpu_custom_call.1} parent=5 // pred_check
        _
      $region10: #{tpu_custom_call.1} parent=5 // pred_check_branch
        %291 = sbr.rel (%p288) target = $region12
      $region11: #{tpu_custom_call.1} parent=5 // pred_region
        %s292 = ssub.s32 %s22, 1
        // Predicated region
        $region13: #{tpu_custom_call.1} parent=11 // pred_check
          %p293 = pneg %p43
        $region14: #{tpu_custom_call.1} parent=11 // pred_check_branch
          %295 = sbr.rel (%p293) target = $region16
        $region15: #{tpu_custom_call.1} parent=11 // pred_region
          %s297 = ssub.s32 16, 16
          %298 = vsyncadd [#allocation4], %s297
          %s300 = sshll.u32 %s0, 4
          %s301 = int_to_ptr.vmem [resolvable:$true] %s300
          %303 = dma.vmem_to_smem %s301, 16, [#allocation2], [#allocation4]
        $region16: #{tpu_custom_call.1} parent=11 // pred_fallthru
          _
        // Predicated region
        $region17: #{tpu_custom_call.1} parent=11 // pred_check
          %p304 = pneg %p64
        $region18: #{tpu_custom_call.1} parent=11 // pred_check_branch
          %306 = sbr.rel (%p304) target = $region20
        $region19: #{tpu_custom_call.1} parent=11 // pred_region
          %s308 = ssub.s32 16, 16
          %309 = vsyncadd [#allocation6], %s308
          %s311 = sshll.u32 %s1, 4
          %s312 = int_to_ptr.vmem [resolvable:$true] %s311
          %314 = dma.vmem_to_smem %s312, 16, [#allocation5], [#allocation6]
        $region20: #{tpu_custom_call.1} parent=11 // pred_fallthru
          _
        // Predicated region
        $region21: #{tpu_custom_call.1} parent=11 // pred_check
          %p315 = pneg %p163
        $region22: #{tpu_custom_call.1} parent=11 // pred_check_branch
          %317 = sbr.rel (%p315) target = $region24
        $region23: #{tpu_custom_call.1} parent=11 // pred_region
          _
        $region24: #{tpu_custom_call.1} parent=11 // pred_fallthru
          _
        // Predicated region
        $region25: #{tpu_custom_call.1} parent=11 // pred_check
          %p318 = pneg %p184
        $region26: #{tpu_custom_call.1} parent=11 // pred_check_branch
          %320 = sbr.rel (%p318) target = $region28
        $region27: #{tpu_custom_call.1} parent=11 // pred_region
          _
        $region28: #{tpu_custom_call.1} parent=11 // pred_fallthru
          _
        // Predicated region
        $region29: #{tpu_custom_call.1} parent=11 // pred_check
          %p321 = pneg %p205
        $region30: #{tpu_custom_call.1} parent=11 // pred_check_branch
          %323 = sbr.rel (%p321) target = $region32
        $region31: #{tpu_custom_call.1} parent=11 // pred_region
          _
        $region32: #{tpu_custom_call.1} parent=11 // pred_fallthru
          _
        // Predicated region
        $region33: #{tpu_custom_call.1} parent=11 // pred_check
          %p324 = pneg %p226
        $region34: #{tpu_custom_call.1} parent=11 // pred_check_branch
          %326 = sbr.rel (%p324) target = $region36
        $region35: #{tpu_custom_call.1} parent=11 // pred_region
          _
        $region36: #{tpu_custom_call.1} parent=11 // pred_fallthru
          _
      $region12: #{tpu_custom_call.1} parent=5 // pred_fallthru
        _
      %p327 = scmp.lt.s32.totalorder %s22, 2
      // Predicated region
      $region37: #{tpu_custom_call.1} parent=5 // pred_check
        %p328 = pneg %p327
      $region38: #{tpu_custom_call.1} parent=5 // pred_check_branch
        %330 = sbr.rel (%p328) target = $region40
      $region39: #{tpu_custom_call.1} parent=5 // pred_region
        // Predicated region
        $region41: #{tpu_custom_call.1} parent=39 // pred_check
          %p331 = pneg %p84
        $region42: #{tpu_custom_call.1} parent=39 // pred_check_branch
          %333 = sbr.rel (%p331) target = $region44
        $region43: #{tpu_custom_call.1} parent=39 // pred_region
          %p334 = scmp.lt.s32.totalorder %s22, 1
          %s335 = scalar_select %p334, %s22, 1
          %s336 = smul.addr %s335, 2
          %s337 = smul.addr %s336, 4
          %s338 = scalar_lea.vmem %s2, %s337
        $region44: #{tpu_custom_call.1} parent=39 // pred_fallthru
          _
        // Predicated region
        $region45: #{tpu_custom_call.1} parent=39 // pred_check
          %p339 = pneg %p110
        $region46: #{tpu_custom_call.1} parent=39 // pred_check_branch
          %341 = sbr.rel (%p339) target = $region48
        $region47: #{tpu_custom_call.1} parent=39 // pred_region
          %p342 = scmp.lt.s32.totalorder %s22, 1
          %s343 = scalar_select %p342, %s22, 1
          %s344 = smul.addr %s343, 2
          %s345 = smul.addr %s344, 4
          %s346 = scalar_lea.vmem %s3, %s345
        $region48: #{tpu_custom_call.1} parent=39 // pred_fallthru
          _
        // Predicated region
        $region49: #{tpu_custom_call.1} parent=39 // pred_check
          %p347 = pneg %p136
        $region50: #{tpu_custom_call.1} parent=39 // pred_check_branch
          %349 = sbr.rel (%p347) target = $region52
        $region51: #{tpu_custom_call.1} parent=39 // pred_region
          %p350 = scmp.lt.s32.totalorder %s22, 1
          %s351 = scalar_select %p350, %s22, 1
          %s352 = smul.addr %s351, 4
          %s353 = smul.addr %s352, 8
          %s354 = scalar_lea.vmem %s4, %s353
        $region52: #{tpu_custom_call.1} parent=39 // pred_fallthru
          _
      $region40: #{tpu_custom_call.1} parent=5 // pred_fallthru
        _
      %p355 = scmp.le.s32.totalorder 1, %s22
      %p356 = scmp.lt.s32.totalorder %s22, 3
      %p357 = pnand %p355, %p356
      %p358 = pneg %p357
      // Predicated region
      $region53: #{tpu_custom_call.1} parent=5 // pred_check
        _
      $region54: #{tpu_custom_call.1} parent=5 // pred_check_branch
        %360 = sbr.rel (%p357) target = $region56
      $region55: #{tpu_custom_call.1} parent=5 // pred_region
        %s361 = ssub.s32 %s22, 1
        // Predicated region
        $region57: #{tpu_custom_call.1} parent=55 // pred_check
          %p362 = pneg %p43
        $region58: #{tpu_custom_call.1} parent=55 // pred_check_branch
          %364 = sbr.rel (%p362) target = $region60
        $region59: #{tpu_custom_call.1} parent=55 // pred_region
          %365 = dma.done [#allocation4], 16
        $region60: #{tpu_custom_call.1} parent=55 // pred_fallthru
          _
        // Predicated region
        $region61: #{tpu_custom_call.1} parent=55 // pred_check
          %p366 = pneg %p64
        $region62: #{tpu_custom_call.1} parent=55 // pred_check_branch
          %368 = sbr.rel (%p366) target = $region64
        $region63: #{tpu_custom_call.1} parent=55 // pred_region
          %369 = dma.done [#allocation6], 16
        $region64: #{tpu_custom_call.1} parent=55 // pred_fallthru
          _
        %370 = sfence
        %p371 = pneg %p43
        %p372 = pneg %p40
        %p373 = pneg %p64
        %p374 = pneg %p61
        %p375 = scmp.lt.s32.totalorder %s27, 1
        %s376 = scalar_select %p375, %s27, 1
        %s377 = smul.addr %s376, 2
        %s378 = smul.addr %s377, 4
        %s379 = scalar_lea.vmem %s2, %s378
        %p380 = pneg %p90
        %p381 = pneg %p87
        %p382 = scmp.lt.s32.totalorder %s27, 1
        %s383 = scalar_select %p382, %s27, 1
        %s384 = smul.addr %s383, 2
        %s385 = smul.addr %s384, 4
        %s386 = scalar_lea.vmem %s3, %s385
        %p387 = pneg %p116
        %p388 = pneg %p113
        %p389 = scmp.lt.s32.totalorder %s27, 1
        %s390 = scalar_select %p389, %s27, 1
        %s391 = smul.addr %s390, 4
        %s392 = smul.addr %s391, 8
        %s393 = scalar_lea.vmem %s4, %s392
        %p394 = pneg %p142
        %p395 = pneg %p139
        %p396 = pneg %p163
        %p397 = pneg %p160
        %p398 = pneg %p184
        %p399 = pneg %p181
        %p400 = pneg %p205
        %p401 = pneg %p202
        %p402 = pneg %p226
        %p403 = pneg %p223
        %p404 = pneg %p252
        %p405 = pneg %p249
        %s406 = sand.u32 %s239, 1
        %s407 = scalar_lea.sflag [#allocation3], %s406
        %s408 = sand.u32 %s239, 1
        %s409 = smul.addr %s408, 8
        %s410 = scalar_lea.vmem [#allocation7], %s409
        %p411 = pneg %p278
        %p412 = pneg %p275
        %p413 = scmp.lt.s32.totalorder %s27, 1
        %s414 = scalar_select %p413, %s27, 1
        %s415 = scalar_lea.vmem %s10, %s414
        %p416 = scmp.lt.s32.totalorder %s27, 1
        %s417 = scalar_select %p416, %s27, 1
        %s418 = smul.addr %s417, 2
        %s419 = smul.addr %s418, 4
        %s420 = scalar_lea.vmem %s2, %s419
        %p421 = scmp.lt.s32.totalorder %s27, 1
        %s422 = scalar_select %p421, %s27, 1
        %s423 = smul.addr %s422, 2
        %s424 = smul.addr %s423, 4
        %s425 = scalar_lea.vmem %s3, %s424
        %p426 = scmp.lt.s32.totalorder %s27, 1
        %s427 = scalar_select %p426, %s27, 1
        %s428 = smul.addr %s427, 4
        %s429 = smul.addr %s428, 8
        %s430 = scalar_lea.vmem %s4, %s429
        %p431 = scmp.lt.s32.totalorder %s27, 1
        %s432 = scalar_select %p431, %s27, 1
        %s433 = scalar_lea.vmem %s10, %s432
        %s434 = sld [smem:[#allocation2 + %s27]]
        %s435 = sld [smem:[#allocation5 + %s27]]
        %v436 = vld [vmem:[%s420] sm:$0xff]
        %v437 = vld [vmem:[%s425] sm:$0xff]
        %v438 = vstv %s434
        %v439 = vmul.f32 %v438, %v436
        %v440 = vstv %s435
        %v441 = vmul.f32 %v440, %v437
        %v442 = vadd.f32 %v439, %v441
        %v443 = vld [vmem:[%s5] sm:$0xff]
        %v444 = vld [vmem:[%s5 + $0x8] sm:$0xff]
        %v445 = vld [vmem:[%s5 + $0x10] sm:$0xff]
        %v446 = vld [vmem:[%s5 + $0x18] sm:$0xff]
        %v447 = vld [vmem:[%s6] sm:$0xff]
        %v448 = vld [vmem:[%s6 + $0x8] sm:$0xff]
        %v449 = vld [vmem:[%s6 + $0x10] sm:$0xff]
        %v450 = vld [vmem:[%s6 + $0x18] sm:$0xff]
        %452 = vset.pattern.permute.xlu0 0
        %453 = vperm.xlu0 %452, %v447
        %v454 = vpop.permute.xlu0 %453
        %457 = vset.pattern.permute.xlu0 0
        %458 = vperm.xlu0 %457, %v448
        %v459 = vpop.permute.xlu0 %458
        %462 = vset.pattern.permute.xlu0 0
        %463 = vperm.xlu0 %462, %v449
        %v464 = vpop.permute.xlu0 %463
        %467 = vset.pattern.permute.xlu0 0
        %468 = vperm.xlu0 %467, %v450
        %v469 = vpop.permute.xlu0 %468
        %v472 = vcombine.high %v442, %v442
        %vm473 = vcmask 31744
        %v475 = vsel %vm473, %v443, 0
        %v478 = vsel %vm473, %v444, 0
        %v481 = vsel %vm473, %v445, 0
        %v484 = vsel %vm473, %v446, 0
        %vm486 = vcmask 1043456
        %v487 = vsel %vm486, %v442, 0
        %v489 = vsel %vm486, %v472, 0
        %491 = vmatprep.subr.mxu0 %v489
        %492 = vmatpush1.msra.mxu0 %v487
        %493 = vmatprep.subr.mxu0 0.0
        %494 = vmatpush1.msra.mxu0 0.0
        %495 = vmatprep.subr.mxu0 0.0
        %496 = vmatpush1.msra.mxu0 0.0
        %497 = vmatprep.subr.mxu0 0.0
        %498 = vmatpush1.msra.mxu0 0.0
        %499 = vmatprep.subr.mxu0 0.0
        %500 = vmatpush1.msra.mxu0 0.0
        %501 = vmatprep.subr.mxu0 0.0
        %502 = vmatpush1.msra.mxu0 0.0
        %503 = vmatprep.subr.mxu0 0.0
        %504 = vmatpush1.msra.mxu0 0.0
        %505 = vmatprep.subr.mxu0 0.0
        %506 = vmatpush1.msra.mxu0 0.0
        %507 = vmatprep.subr.mxu0 0.0
        %508 = vmatpush1.msra.mxu0 0.0
        %509 = vmatprep.subr.mxu0 0.0
        %510 = vmatpush1.msra.mxu0 0.0
        %511 = vmatprep.subr.mxu0 0.0
        %512 = vmatpush1.msra.mxu0 0.0
        %513 = vmatprep.subr.mxu0 0.0
        %514 = vmatpush1.msra.mxu0 0.0
        %515 = vmatprep.subr.mxu0 0.0
        %516 = vmatpush1.msra.mxu0 0.0
        %517 = vmatprep.subr.mxu0 0.0
        %518 = vmatpush1.msra.mxu0 0.0
        %519 = vmatprep.subr.mxu0 0.0
        %520 = vmatpush1.msra.mxu0 0.0
        %521 = vmatprep.subr.mxu0 0.0
        %522 = vmatpush1.msra.mxu0 0.0
        %523 = vmatprep.subr.mxu0 0.0
        %524 = vmatpush1.msra.mxu0 0.0
        %525 = vmatprep.subr.mxu0 0.0
        %526 = vmatpush1.msra.mxu0 0.0
        %527 = vmatprep.subr.mxu0 0.0
        %528 = vmatpush1.msra.mxu0 0.0
        %529 = vmatprep.subr.mxu0 0.0
        %530 = vmatpush1.msra.mxu0 0.0
        %531 = vmatprep.subr.mxu0 0.0
        %532 = vmatpush1.msra.mxu0 0.0
        %533 = vmatprep.subr.mxu0 0.0
        %534 = vmatpush1.msra.mxu0 0.0
        %535 = vmatprep.subr.mxu0 0.0
        %536 = vmatpush1.msra.mxu0 0.0
        %537 = vmatprep.subr.mxu0 0.0
        %538 = vmatpush1.msra.mxu0 0.0
        %539 = vmatprep.subr.mxu0 0.0
        %540 = vmatpush1.msra.mxu0 0.0
        %541 = vmatprep.subr.mxu0 0.0
        %542 = vmatpush1.msra.mxu0 0.0
        %543 = vmatprep.subr.mxu0 0.0
        %544 = vmatpush1.msra.mxu0 0.0
        %545 = vmatprep.subr.mxu0 0.0
        %546 = vmatpush1.msra.mxu0 0.0
        %547 = vmatprep.subr.mxu0 0.0
        %548 = vmatpush1.msra.mxu0 0.0
        %549 = vmatprep.subr.mxu0 0.0
        %550 = vmatpush1.msra.mxu0 0.0
        %551 = vmatprep.subr.mxu0 0.0
        %552 = vmatpush1.msra.mxu0 0.0
        %553 = vmatprep.subr.mxu0 0.0
        %554 = vmatpush1.msra.mxu0 0.0
        %555 = vmatprep.mubr.f32.mxu0 0.0
        %556 = vmatmul.mubr.f32.gmra.mrb[0].mxu0 %v475
        %v557 = vpop.f32.mrb[0].mxu0
        %v558 = vadd.f32 %v454, %v557
        %v559 = vpop.f32.mrb[0].mxu0
        %v560 = vadd.f32 %v454, %v559
        %561 = vmatprep.mubr.f32.mxu0 0.0
        %562 = vmatmul.mubr.f32.gmra.mrb[0].mxu0 %v478
        %v563 = vpop.f32.mrb[0].mxu0
        %v564 = vadd.f32 %v459, %v563
        %v565 = vpop.f32.mrb[0].mxu0
        %v566 = vadd.f32 %v459, %v565
        %567 = vmatprep.mubr.f32.mxu0 0.0
        %568 = vmatmul.mubr.f32.gmra.mrb[0].mxu0 %v481
        %v569 = vpop.f32.mrb[0].mxu0
        %v570 = vadd.f32 %v464, %v569
        %v571 = vpop.f32.mrb[0].mxu0
        %v572 = vadd.f32 %v464, %v571
        %573 = vmatprep.mubr.f32.mxu0 0.0
        %574 = vmatmul.mubr.f32.gmra.mrb[0].mxu0 %v484
        %v575 = vpop.f32.mrb[0].mxu0
        %v576 = vadd.f32 %v469, %v575
        %v577 = vpop.f32.mrb[0].mxu0
        %v578 = vadd.f32 %v469, %v577
        %579 = vdwg.mxu0
        %v580 = vld [vmem:[%s430] sm:$0xff]
        %v581 = vld [vmem:[%s430 + $0x8] sm:$0xff]
        %v582 = vld [vmem:[%s430 + $0x10] sm:$0xff]
        %v583 = vld [vmem:[%s430 + $0x18] sm:$0xff]
        %585 = vset.pattern.permute.xlu0 0
        %586 = vperm.xlu0 %585, %v580
        %v587 = vpop.permute.xlu0 %586
        %590 = vset.pattern.permute.xlu0 0
        %591 = vperm.xlu0 %590, %v581
        %v592 = vpop.permute.xlu0 %591
        %595 = vset.pattern.permute.xlu0 0
        %596 = vperm.xlu0 %595, %v582
        %v597 = vpop.permute.xlu0 %596
        %600 = vset.pattern.permute.xlu0 0
        %601 = vperm.xlu0 %600, %v583
        %v602 = vpop.permute.xlu0 %601
        %v604 = vadd.f32 %v558, %v587
        %v605 = vadd.f32 %v560, %v587
        %v606 = vadd.f32 %v564, %v592
        %v607 = vadd.f32 %v566, %v592
        %v608 = vadd.f32 %v570, %v597
        %v609 = vadd.f32 %v572, %v597
        %v610 = vadd.f32 %v576, %v602
        %v611 = vadd.f32 %v578, %v602
        %v612 = vmax.f32 %v604, 0.0
        %v613 = vmax.f32 %v605, 0.0
        %v614 = vmax.f32 %v606, 0.0
        %v615 = vmax.f32 %v607, 0.0
        %v616 = vmax.f32 %v608, 0.0
        %v617 = vmax.f32 %v609, 0.0
        %v618 = vmax.f32 %v610, 0.0
        %v619 = vmax.f32 %v611, 0.0
        %v620 = vld [vmem:[%s7] sm:$0xf]
        %v621 = vld [vmem:[%s8] sm:$0xf]
        %623 = vset.pattern.permute.xlu0 0
        %624 = vperm.xlu0 %623, %v621
        %v625 = vpop.permute.xlu0 %624
        %vm627 = vcmask 261120
        %v629 = vsel %vm627, %v620, 0
        %631 = vmatprep.subr.mxu0 %v613
        %632 = vmatpush1.msra.mxu0 %v612
        %633 = vmatprep.subr.mxu0 %v615
        %634 = vmatpush1.msra.mxu0 %v614
        %635 = vmatprep.subr.mxu0 %v617
        %636 = vmatpush1.msra.mxu0 %v616
        %637 = vmatprep.subr.mxu0 %v619
        %638 = vmatpush1.msra.mxu0 %v618
        %639 = vmatprep.subr.mxu0 0.0
        %640 = vmatpush1.msra.mxu0 0.0
        %641 = vmatprep.subr.mxu0 0.0
        %642 = vmatpush1.msra.mxu0 0.0
        %643 = vmatprep.subr.mxu0 0.0
        %644 = vmatpush1.msra.mxu0 0.0
        %645 = vmatprep.subr.mxu0 0.0
        %646 = vmatpush1.msra.mxu0 0.0
        %647 = vmatprep.subr.mxu0 0.0
        %648 = vmatpush1.msra.mxu0 0.0
        %649 = vmatprep.subr.mxu0 0.0
        %650 = vmatpush1.msra.mxu0 0.0
        %651 = vmatprep.subr.mxu0 0.0
        %652 = vmatpush1.msra.mxu0 0.0
        %653 = vmatprep.subr.mxu0 0.0
        %654 = vmatpush1.msra.mxu0 0.0
        %655 = vmatprep.subr.mxu0 0.0
        %656 = vmatpush1.msra.mxu0 0.0
        %657 = vmatprep.subr.mxu0 0.0
        %658 = vmatpush1.msra.mxu0 0.0
        %659 = vmatprep.subr.mxu0 0.0
        %660 = vmatpush1.msra.mxu0 0.0
        %661 = vmatprep.subr.mxu0 0.0
        %662 = vmatpush1.msra.mxu0 0.0
        %663 = vmatprep.subr.mxu0 0.0
        %664 = vmatpush1.msra.mxu0 0.0
        %665 = vmatprep.subr.mxu0 0.0
        %666 = vmatpush1.msra.mxu0 0.0
        %667 = vmatprep.subr.mxu0 0.0
        %668 = vmatpush1.msra.mxu0 0.0
        %669 = vmatprep.subr.mxu0 0.0
        %670 = vmatpush1.msra.mxu0 0.0
        %671 = vmatprep.subr.mxu0 0.0
        %672 = vmatpush1.msra.mxu0 0.0
        %673 = vmatprep.subr.mxu0 0.0
        %674 = vmatpush1.msra.mxu0 0.0
        %675 = vmatprep.subr.mxu0 0.0
        %676 = vmatpush1.msra.mxu0 0.0
        %677 = vmatprep.subr.mxu0 0.0
        %678 = vmatpush1.msra.mxu0 0.0
        %679 = vmatprep.subr.mxu0 0.0
        %680 = vmatpush1.msra.mxu0 0.0
        %681 = vmatprep.subr.mxu0 0.0
        %682 = vmatpush1.msra.mxu0 0.0
        %683 = vmatprep.subr.mxu0 0.0
        %684 = vmatpush1.msra.mxu0 0.0
        %685 = vmatprep.subr.mxu0 0.0
        %686 = vmatpush1.msra.mxu0 0.0
        %687 = vmatprep.subr.mxu0 0.0
        %688 = vmatpush1.msra.mxu0 0.0
        %689 = vmatprep.subr.mxu0 0.0
        %690 = vmatpush1.msra.mxu0 0.0
        %691 = vmatprep.subr.mxu0 0.0
        %692 = vmatpush1.msra.mxu0 0.0
        %693 = vmatprep.subr.mxu0 0.0
        %694 = vmatpush1.msra.mxu0 0.0
        %695 = vmatprep.mubr.f32.mxu0 0.0
        %696 = vmatmul.mubr.f32.gmra.mrb[0].mxu0 %v629
        %v697 = vpop.f32.mrb[0].mxu0
        %v698 = vadd.f32 %v625, %v697
        %v699 = vpop.f32.mrb[0].mxu0
        %v700 = vadd.f32 %v625, %v699
        %701 = vdwg.mxu0
        %v704 = vcombine.low %v698, %v700
        %706 = vst [vmem:[%s410] sm:$0xff] %v704
        %v707 = vsub.f32 %v437, %v704
        %v708 = vmul.f32 %v707, %v707
        %v710 = vcombine.high %v708, %v708
        %v712 = vsel %vm486, %v708, 0.0
        %v713 = vsel %vm486, %v710, 0.0
        %v714 = vadd.f32 %v712, %v713
        %715 = vadd.xlane.f32.xlu0 %v714
        %v716 = vpop.xlane.xlu0 %715
        %v717 = vrot.slane %v716, 4
        %v718 = vadd.f32 %v716, %v717
        %v719 = vrot.slane %v718, 2
        %v720 = vadd.f32 %v718, %v719
        %v721 = vrot.slane %v720, 1
        %v722 = vadd.f32 %v720, %v721
        %s723 = vtos %v722
        %v724 = vstv %s723
        %vm725 = vcmask 0
        %726 = vst.msk [vmem:[%s433] sm:$0x1] %vm725, %v724
        %s727 = sand.u32 %s239, 1
        %s728 = scalar_lea.sflag [#allocation3], %s727
        %s729 = sand.u32 %s239, 1
        %s730 = smul.addr %s729, 8
        %s731 = scalar_lea.vmem [#allocation7], %s730
        %p732 = scmp.lt.s32.totalorder %s27, 1
        %s733 = scalar_select %p732, %s27, 1
        %s734 = scalar_lea.vmem %s10, %s733
        // Predicated region
        $region65: #{tpu_custom_call.1} parent=55 // pred_check
          %p735 = pneg %p249
        $region66: #{tpu_custom_call.1} parent=55 // pred_check_branch
          %737 = sbr.rel (%p735) target = $region68
        $region67: #{tpu_custom_call.1} parent=55 // pred_region
          %s739 = ssub.s32 128, 128
          %740 = vsyncadd %s728, %s739
          %s741 = smul.addr %s27, 2
          %s742 = smul.addr %s741, 64
          %s743 = scalar_lea.hbm %s9, %s742
          %s745 = sshll.u32 %s731, 4
          %s746 = int_to_ptr.vmem [resolvable:$true] %s745
          %748 = dma.vmem_to_hbm [thread:$0]  %s746, 128, %s743, %s728
        $region68: #{tpu_custom_call.1} parent=55 // pred_fallthru
          _
        // Predicated region
        $region69: #{tpu_custom_call.1} parent=55 // pred_check
          %p749 = pneg %p275
        $region70: #{tpu_custom_call.1} parent=55 // pred_check_branch
          %751 = sbr.rel (%p749) target = $region72
        $region71: #{tpu_custom_call.1} parent=55 // pred_region
          _
        $region72: #{tpu_custom_call.1} parent=55 // pred_fallthru
          _
      $region56: #{tpu_custom_call.1} parent=5 // pred_fallthru
        _
      %p752 = scmp.le.s32.totalorder 2, %s22
      // Predicated region
      $region73: #{tpu_custom_call.1} parent=5 // pred_check
        %p753 = pneg %p752
      $region74: #{tpu_custom_call.1} parent=5 // pred_check_branch
        %755 = sbr.rel (%p753) target = $region76
      $region75: #{tpu_custom_call.1} parent=5 // pred_region
        %s756 = ssub.s32 %s22, 2
        // Predicated region
        $region77: #{tpu_custom_call.1} parent=75 // pred_check
          %p757 = pneg %p255
        $region78: #{tpu_custom_call.1} parent=75 // pred_check_branch
          %759 = sbr.rel (%p757) target = $region80
        $region79: #{tpu_custom_call.1} parent=75 // pred_region
          %s760 = sand.u32 %s240, 1
          %s761 = scalar_lea.sflag [#allocation3], %s760
          %s762 = sand.u32 %s240, 1
          %s763 = smul.addr %s762, 8
          %s764 = scalar_lea.vmem [#allocation7], %s763
          %765 = dma.done %s761, 128
        $region80: #{tpu_custom_call.1} parent=75 // pred_fallthru
          _
        // Predicated region
        $region81: #{tpu_custom_call.1} parent=75 // pred_check
          %p766 = pneg %p281
        $region82: #{tpu_custom_call.1} parent=75 // pred_check_branch
          %768 = sbr.rel (%p766) target = $region84
        $region83: #{tpu_custom_call.1} parent=75 // pred_region
          %p769 = scmp.lt.s32.totalorder %s28, 1
          %s770 = scalar_select %p769, %s28, 1
          %s771 = scalar_lea.vmem %s10, %s770
        $region84: #{tpu_custom_call.1} parent=75 // pred_fallthru
          _
      $region76: #{tpu_custom_call.1} parent=5 // pred_fallthru
        _
    $region6: #{tpu_custom_call.1} parent=1 // loop_footer
      %s26 = sadd.s32 1, %s22
    $region7: #{tpu_custom_call.1} parent=1 // loop_footer_branch
      %21 = sbr.rel target = $region3
    $region8: #{tpu_custom_call.1} parent=1 // loop_exit
      _
    %772 = vsyncpa [#allocation3], 1
    %s773 = scalar_lea.sflag [#allocation3], 1
    %774 = vsyncpa %s773, 1
    %775 = vsyncpa [#allocation4], 1
    %s776 = scalar_lea.sflag [#allocation4], 1
    %777 = vsyncpa %s776, 1
    %778 = vsyncpa [#allocation6], 1

</llo_original>
